<compile_context>
chip_gen: v7x
topology: tpu7x:2x2x1
jax: 0.10.0
libtpu: 0.0.40
codegen_flags: <defaults>
</compile_context>

<pallas_src>
import functools
import math

import jax
import jax.numpy as jnp
import numpy as np
from jax.experimental import pallas as pl
from jax.experimental.pallas import tpu as pltpu

_LANE = 128
_ACC_BUDGET_BYTES = 4 * 1024 * 1024  # f32 accumulator slab budget


def _round_up(v: int, m: int) -> int:
    return ((v + m - 1) // m) * m


def _bin_sum_kernel(x_ref, o_ref, acc_ref, *, post, tile_q):
    # x_ref: (1, bins, tile_q) native dtype; acc_ref: (bins, tile_q) f32.
    q = pl.program_id(1)
    nq = pl.num_programs(1)

    @pl.when(q == 0)
    def _():
        acc_ref[...] = jnp.zeros_like(acc_ref)

    if post % tile_q == 0:
        # Hot path: full blocks, pure lane-dense VPU accumulation.
        acc_ref[...] += x_ref[0].astype(jnp.float32)
    else:
        # Ragged tail: only the final lane-tile carries out-of-range lanes
        # (their contents are undefined), so only that block is masked.
        @pl.when(q < nq - 1)
        def _():
            acc_ref[...] += x_ref[0].astype(jnp.float32)

        @pl.when(q == nq - 1)
        def _():
            xb = x_ref[0].astype(jnp.float32)
            lane = jax.lax.broadcasted_iota(jnp.int32, xb.shape, dimension=1)
            valid = (q * tile_q + lane) < post
            acc_ref[...] += jnp.where(valid, xb, jnp.float32(0.0))

    @pl.when(q == nq - 1)
    def _():
        # Single deferred cross-lane reduce; (bins, 1) stays sublane-aligned.
        o_ref[0] = jnp.sum(acc_ref[...], axis=1, keepdims=True)


def discretization_loss(x, *, dim: int, expected_variance: float):
    """Pallas implementation of DiscretizationLoss.forward (store_past=0)."""
    shape = x.shape
    bins = shape[dim]
    pre = math.prod(shape[:dim])          # product of leading dims (>=1)
    post = math.prod(shape[dim + 1:])     # product of trailing dims (>=1)

    # Pure reshape — no transpose / extra HBM pass: `dim` stays interior.
    x3 = x.reshape(pre, bins, post)

    # Lane tile: multiple of 128, capped so input double-buffer + f32
    # accumulator slab stay within the v5e 16 MiB scoped-VMEM default.
    max_tq = max(_LANE, (_ACC_BUDGET_BYTES // (bins * 4)) // _LANE * _LANE)
    tile_q = min(max_tq, _round_up(post, _LANE))
    grid = (pre, pl.cdiv(post, tile_q))

    kernel = functools.partial(_bin_sum_kernel, post=post, tile_q=tile_q)

    partial = pl.pallas_call(
        kernel,
        out_shape=jax.ShapeDtypeStruct((pre, bins, 1), jnp.float32),
        grid_spec=pltpu.PrefetchScalarGridSpec(
            num_scalar_prefetch=0,
            grid=grid,
            in_specs=[pl.BlockSpec((1, bins, tile_q), lambda p, q: (p, 0, q))],
            out_specs=pl.BlockSpec((1, bins, 1), lambda p, q: (p, 0, 0)),
            scratch_shapes=[pltpu.VMEM((bins, tile_q), jnp.float32)],
        ),
        compiler_params=pltpu.CompilerParams(
            # `pre` rows produce independent partial sums -> shardable across
            # TensorCores (v7x megacore); lane-tile axis is the reduction.
            dimension_semantics=("parallel", "arbitrary"),
        ),
        cost_estimate=pl.CostEstimate(
            flops=2 * x.size,
            transcendentals=0,
            bytes_accessed=x.size * x.dtype.itemsize + pre * bins * 4,
        ),
    )(x3)

    # Tiny O(pre*bins) finalize in plain JAX; constant term hoisted out.
    bin_sum = jnp.sum(partial[:, :, 0], axis=0)            # (bins,)
    averaged = bin_sum / jnp.sum(bin_sum)
    averaged = averaged - jnp.mean(averaged)
    scale = float(expected_variance)
    const = bins * (math.log(scale) + 0.5 * math.log(2.0 * math.pi))
    return jnp.sum(averaged * averaged) / (2.0 * scale * scale) + const


def _reference(x, dim, expected_variance):
    other = tuple(i for i in range(x.ndim) if i != dim)
    averaged = x.sum(axis=other) / x.sum()
    averaged = averaged - averaged.mean()
    scale = expected_variance
    nll = (averaged ** 2) / (2.0 * scale ** 2) \
        + math.log(scale) + 0.5 * math.log(2.0 * math.pi)
    return jnp.sum(nll)


if __name__ == "__main__":
    # Module config consistent with xtts_dvae usage: discrete_bins along dim=1.
    discrete_bins = 32
    dim = 1
    expected_variance = 1.0 / 32.0

    key = jax.random.PRNGKey(0)
    # x: (batch, discrete_bins, H, W) — softmax-like non-negative values.
    x = jax.nn.softmax(
        jax.random.normal(key, (2, discrete_bins, 16, 16), dtype=jnp.float32),
        axis=dim,
    )

    loss_fn = jax.jit(functools.partial(
        discretization_loss, dim=dim, expected_variance=expected_variance))
    loss = jax.block_until_ready(loss_fn(x))

    ref = _reference(x, dim, expected_variance)
    assert np.allclose(np.asarray(loss), np.asarray(ref), rtol=1e-5, atol=1e-4), (
        float(loss), float(ref))

    print("KERNEL_OK")
</pallas_src>

<mosaic_0001>
module attributes {stable_mosaic.version = 11 : i64} {
  func.func @_bin_sum_kernel(%arg0: i32, %arg1: i32, %arg2: memref<1x32x256xf32, #tpu.memory_space<vmem>>, %arg3: memref<1x32x1xf32, #tpu.memory_space<vmem>>, %arg4: memref<32x256xf32, #tpu.memory_space<vmem>>) attributes {dimension_semantics = [#tpu.dimension_semantics<parallel>, #tpu.dimension_semantics<arbitrary>], iteration_bounds = array<i64: 2, 1>, scalar_prefetch = 0 : i64, scratch_operands = 1 : i64, tpu.core_type = #tpu.core_type<tc>, window_params = [{transform_indices = @transform_0, window_bounds = array<i64: 1, 32, 256>}, {transform_indices = @transform_1, window_bounds = array<i64: 1, 32, 1>}]} {
    %c0_i32 = arith.constant 0 : i32
    %0 = arith.cmpi eq, %arg1, %c0_i32 : i32
    %1 = arith.extui %0 : i1 to i32
    %c0_i32_0 = arith.constant 0 : i32
    %2 = arith.cmpi ne, %1, %c0_i32_0 : i32
    scf.if %2 {
      %cst = arith.constant 0.000000e+00 : f32
      %11 = vector.broadcast %cst : f32 to vector<32x256xf32>
      %c0_9 = arith.constant 0 : index
      %c0_10 = arith.constant 0 : index
      %12 = vector.load %arg4[%c0_9, %c0_10] : memref<32x256xf32, #tpu.memory_space<vmem>>, vector<32x256xf32>
      tpu.vector_store %arg4[%c0_9, %c0_10], %11 {strides = array<i32>} : memref<32x256xf32, #tpu.memory_space<vmem>>, vector<32x256xf32>,
    } else {
    }
    %c0 = arith.constant 0 : index
    %c0_1 = arith.constant 0 : index
    %3 = vector.load %arg4[%c0, %c0_1] : memref<32x256xf32, #tpu.memory_space<vmem>>, vector<32x256xf32>
    %c0_2 = arith.constant 0 : index
    %c0_3 = arith.constant 0 : index
    %c0_4 = arith.constant 0 : index
    %4 = vector.load %arg2[%c0_2, %c0_3, %c0_4] : memref<1x32x256xf32, #tpu.memory_space<vmem>>, vector<1x32x256xf32>
    %5 = vector.shape_cast %4 : vector<1x32x256xf32> to vector<32x256xf32>
    %6 = arith.addf %3, %5 : vector<32x256xf32>
    %c0_5 = arith.constant 0 : index
    %c0_6 = arith.constant 0 : index
    %7 = vector.load %arg4[%c0_5, %c0_6] : memref<32x256xf32, #tpu.memory_space<vmem>>, vector<32x256xf32>
    tpu.vector_store %arg4[%c0_5, %c0_6], %6 {strides = array<i32>} : memref<32x256xf32, #tpu.memory_space<vmem>>, vector<32x256xf32>,
    %c0_i32_7 = arith.constant 0 : i32
    %8 = arith.cmpi eq, %arg1, %c0_i32_7 : i32
    %9 = arith.extui %8 : i1 to i32
    %c0_i32_8 = arith.constant 0 : i32
    %10 = arith.cmpi ne, %9, %c0_i32_8 : i32
    scf.if %10 {
      %c0_9 = arith.constant 0 : index
      %c0_10 = arith.constant 0 : index
      %11 = vector.load %arg4[%c0_9, %c0_10] : memref<32x256xf32, #tpu.memory_space<vmem>>, vector<32x256xf32>
      %cst = arith.constant dense<0.000000e+00> : vector<32xf32>
      %12 = vector.multi_reduction <add>, %11, %cst [1] : vector<32x256xf32> to vector<32xf32>
      %13 = vector.shape_cast %12 : vector<32xf32> to vector<32x1xf32>
      %c0_11 = arith.constant 0 : index
      %c0_12 = arith.constant 0 : index
      %c0_13 = arith.constant 0 : index
      %14 = vector.load %arg3[%c0_11, %c0_12, %c0_13] : memref<1x32x1xf32, #tpu.memory_space<vmem>>, vector<1x32x1xf32>
      %15 = vector.shape_cast %14 : vector<1x32x1xf32> to vector<32x1xf32>
      %16 = vector.shape_cast %13 : vector<32x1xf32> to vector<1x32x1xf32>
      tpu.vector_store %arg3[%c0_11, %c0_12, %c0_13], %16 {strides = array<i32>} : memref<1x32x1xf32, #tpu.memory_space<vmem>>, vector<1x32x1xf32>,
    } else {
    }
    return
  }
  func.func @transform_0(%arg0: i32, %arg1: i32) -> (i32, i32, i32) {
    %c0_i32 = arith.constant 0 : i32
    %c0_i32_0 = arith.constant 0 : i32
    return %arg0, %c0_i32, %arg1 : i32, i32, i32
  }
  func.func @transform_1(%arg0: i32, %arg1: i32) -> (i32, i32, i32) {
    %c0_i32 = arith.constant 0 : i32
    %c0_i32_0 = arith.constant 0 : i32
    %c0_i32_1 = arith.constant 0 : i32
    return %arg0, %c0_i32, %c0_i32_0 : i32, i32, i32
  }
}

</mosaic_0001>

<llo_original>
// kernel: discretization_loss.1
$region0: #{discretization_loss.1}
  #allocation0 [shape = 'u32[]', space=smem, size = 0x4, offset = 0x4, fixed_abs, tag = 'smem constant byte address 0x4 - core index']
  #allocation1 [shape = 'u32[144,128]{1,0:T(1,128)}', space=vmem, size = 0x12000, scoped, tag = 'internal scratch']
  #allocation2 [shape = 'f32[32,256]{1,0:T(8,128)}', space=vmem, size = 0x8000, scoped, tag = 'scratch operand']
  %s0 = inlined_call_operand.vmem [shape: f32[2,32,256], index: 0, kind: input, shape index: {}]
  %s1 = inlined_call_operand.vmem [shape: f32[2,32,1], index: 1, kind: output, shape index: {}]
  %s2 = sld [smem:[#allocation0]]
  $region45: #{discretization_loss.1} parent=0
    _
  %s4 = ssub.s32 1, %s2
  %s5 = scalar_select 0, %s4, %s2
  loop: start=0, step=1, limit=4
  $region2: #{discretization_loss.1} parent=0 // loop_pre_header
    _
  $region3: #{discretization_loss.1} parent=0 // loop_header
    %s7 = sphi 0, %s11
    %p8 = scmp.ge.s32.totalorder %s7, 4
    %s14 = sphi 0, %s26
    %s15 = sphi 0, %s22
    %s16 = sphi 0, %s14
    %s17 = sphi 0, %s15
    %s18 = sphi 0, %s16
    %s19 = sphi 0, %s17
    %s31 = sphi 0, %s33
    %s34 = sphi 0, %s31
    %s35 = sphi 0, %s34
    %s51 = sphi 0, %s35
    %s57 = sphi 0, %s59
    %s60 = sphi 0, %s57
    %s61 = sphi 0, %s60
    %s77 = sphi 0, %s61
  $region4: #{discretization_loss.1} parent=0 // loop_header_branch
    %10 = sbr.rel (%p8) target = $region8
  $region5: #{discretization_loss.1} parent=0 // loop_body
    %s12 = ssub.s32 %s7, 1
    %s13 = ssub.s32 %s7, 2
    %s20 = sadd.s32 1, %s15
    %p21 = scmp.ge.s32.totalorder %s20, 1
    %s22 = scalar_select %p21, 0, %s20
    %s23 = sadd.s32 1, %s14
    %s24 = scalar_select %p21, %s23, %s14
    %p25 = scmp.ge.s32.totalorder %s24, 2
    %s26 = scalar_select %p25, 0, %s24
    %s27 = ssub.s32 %s14, %s26
    %s28 = ssub.s32 %s15, %s22
    %s29 = sor.u32 %s27, %s28
    %p30 = scmp.eq.s32.totalorder %s29, 0
    %s32 = sadd.s32 %s31, 1
    %s33 = scalar_select %p30, %s31, %s32
    %p36 = pneg %p30
    %p37 = scmp.eq.s32.totalorder %s7, 1
    %p38 = por %p36, %p37
    %p39 = scmp.ne.s32.totalorder %s31, %s34
    %p40 = scmp.eq.s32.totalorder %s7, 0
    %p41 = por %p39, %p40
    %p42 = scmp.ne.s32.totalorder %s31, %s34
    %p43 = scmp.eq.s32.totalorder %s12, 1
    %p44 = por %p42, %p43
    %p45 = scmp.ne.s32.totalorder %s34, %s35
    %p46 = scmp.eq.s32.totalorder %s12, 0
    %p47 = por %p45, %p46
    %p48 = scmp.ne.s32.totalorder %s34, %s35
    %p49 = scmp.eq.s32.totalorder %s13, 1
    %p50 = por %p48, %p49
    %p52 = scmp.ne.s32.totalorder %s35, %s51
    %p53 = scmp.eq.s32.totalorder %s13, 0
    %p54 = por %p52, %p53
    %s55 = ssub.s32 %s14, %s26
    %p56 = scmp.eq.s32.totalorder %s55, 0
    %s58 = sadd.s32 %s57, 1
    %s59 = scalar_select %p56, %s57, %s58
    %p62 = pneg %p56
    %p63 = scmp.eq.s32.totalorder %s7, 1
    %p64 = por %p62, %p63
    %p65 = scmp.ne.s32.totalorder %s57, %s60
    %p66 = scmp.eq.s32.totalorder %s7, 0
    %p67 = por %p65, %p66
    %p68 = scmp.ne.s32.totalorder %s57, %s60
    %p69 = scmp.eq.s32.totalorder %s12, 1
    %p70 = por %p68, %p69
    %p71 = scmp.ne.s32.totalorder %s60, %s61
    %p72 = scmp.eq.s32.totalorder %s12, 0
    %p73 = por %p71, %p72
    %p74 = scmp.ne.s32.totalorder %s60, %s61
    %p75 = scmp.eq.s32.totalorder %s13, 1
    %p76 = por %p74, %p75
    %p78 = scmp.ne.s32.totalorder %s61, %s77
    %p79 = scmp.eq.s32.totalorder %s13, 0
    %p80 = por %p78, %p79
    %p81 = scmp.le.s32.totalorder 1, %s7
    %p82 = scmp.lt.s32.totalorder %s7, 3
    %p83 = pnand %p81, %p82
    %p84 = pneg %p83
    // Predicated region
    $region9: #{discretization_loss.1} parent=5 // pred_check
      _
    $region10: #{discretization_loss.1} parent=5 // pred_check_branch
      %86 = sbr.rel (%p83) target = $region12
    $region11: #{discretization_loss.1} parent=5 // pred_region
      %s87 = ssub.s32 %s7, 1
    $region12: #{discretization_loss.1} parent=5 // pred_fallthru
      _
    %p88 = scmp.lt.s32.totalorder %s7, 2
    // Predicated region
    $region13: #{discretization_loss.1} parent=5 // pred_check
      %p89 = pneg %p88
    $region14: #{discretization_loss.1} parent=5 // pred_check_branch
      %91 = sbr.rel (%p89) target = $region16
    $region15: #{discretization_loss.1} parent=5 // pred_region
      // Predicated region
      $region17: #{discretization_loss.1} parent=15 // pred_check
        %p92 = pneg %p41
      $region18: #{discretization_loss.1} parent=15 // pred_check_branch
        %94 = sbr.rel (%p92) target = $region20
      $region19: #{discretization_loss.1} parent=15 // pred_region
        %s95 = smul.u32 2, %s15
        %p96 = scmp.lt.s32.totalorder %s14, 1
        %s97 = scalar_select %p96, %s14, 1
        %p98 = scmp.lt.s32.totalorder %s95, 1
        %s99 = scalar_select %p98, %s95, 1
        %s100 = smul.addr %s97, 8
        %s101 = sadd.s32 %s99, %s100
        %s102 = smul.addr %s101, 8
        %s103 = scalar_lea.vmem %s0, %s102
        %s104 = smul.u32 2, %s15
      $region20: #{discretization_loss.1} parent=15 // pred_fallthru
        _
    $region16: #{discretization_loss.1} parent=5 // pred_fallthru
      _
    %p105 = scmp.le.s32.totalorder 1, %s7
    %p106 = scmp.lt.s32.totalorder %s7, 3
    %p107 = pnand %p105, %p106
    %p108 = pneg %p107
    // Predicated region
    $region21: #{discretization_loss.1} parent=5 // pred_check
      _
    $region22: #{discretization_loss.1} parent=5 // pred_check_branch
      %110 = sbr.rel (%p107) target = $region24
    $region23: #{discretization_loss.1} parent=5 // pred_region
      %s111 = ssub.s32 %s7, 1
      %s112 = smul.u32 2, %s17
      %p113 = scmp.lt.s32.totalorder %s16, 1
      %s114 = scalar_select %p113, %s16, 1
      %p115 = scmp.lt.s32.totalorder %s112, 1
      %s116 = scalar_select %p115, %s112, 1
      %s117 = smul.addr %s114, 8
      %s118 = sadd.s32 %s116, %s117
      %s119 = smul.addr %s118, 8
      %s120 = scalar_lea.vmem %s0, %s119
      %p121 = pneg %p47
      %p122 = pneg %p44
      %p123 = pneg %p73
      %p124 = pneg %p70
      %p125 = scmp.lt.s32.totalorder %s16, 1
      %s126 = scalar_select %p125, %s16, 1
      %s127 = smul.addr %s126, 4
      %s128 = smul.addr %s127, 8
      %s129 = scalar_lea.vmem %s1, %s128
      %s130 = smul.u32 2, %s17
      %p131 = scmp.lt.s32.totalorder %s16, 1
      %s132 = scalar_select %p131, %s16, 1
      %p133 = scmp.lt.s32.totalorder %s130, 1
      %s134 = scalar_select %p133, %s130, 1
      %s135 = smul.addr %s132, 8
      %s136 = sadd.s32 %s134, %s135
      %s137 = smul.addr %s136, 8
      %s138 = scalar_lea.vmem %s0, %s137
      %s139 = smul.u32 2, %s17
      %p140 = scmp.lt.s32.totalorder %s16, 1
      %s141 = scalar_select %p140, %s16, 1
      %s142 = smul.addr %s141, 4
      %s143 = smul.addr %s142, 8
      %s144 = scalar_lea.vmem %s1, %s143
      %p145 = scmp.eq.s32.totalorder %s17, 0
      // Predicated region
      $region25: #{discretization_loss.1} parent=23 // pred_check
        %p146 = pneg %p145
      $region26: #{discretization_loss.1} parent=23 // pred_check_branch
        %148 = sbr.rel (%p146) target = $region28
      $region27: #{discretization_loss.1} parent=23 // pred_region
        %149 = vst [vmem:[#allocation2] sm:$0xff] 0.0
        %150 = vst [vmem:[#allocation2 + $0x8] sm:$0xff] 0.0
        %151 = vst [vmem:[#allocation2 + $0x10] sm:$0xff] 0.0
        %152 = vst [vmem:[#allocation2 + $0x18] sm:$0xff] 0.0
        %153 = vst [vmem:[#allocation2 + $0x20] sm:$0xff] 0.0
        %154 = vst [vmem:[#allocation2 + $0x28] sm:$0xff] 0.0
        %155 = vst [vmem:[#allocation2 + $0x30] sm:$0xff] 0.0
        %156 = vst [vmem:[#allocation2 + $0x38] sm:$0xff] 0.0
      $region28: #{discretization_loss.1} parent=23 // pred_fallthru
        _
      %v157 = vld [vmem:[#allocation2] sm:$0xff]
      %v158 = vld [vmem:[#allocation2 + $0x8] sm:$0xff]
      %v159 = vld [vmem:[#allocation2 + $0x10] sm:$0xff]
      %v160 = vld [vmem:[#allocation2 + $0x18] sm:$0xff]
      %v161 = vld [vmem:[#allocation2 + $0x20] sm:$0xff]
      %v162 = vld [vmem:[#allocation2 + $0x28] sm:$0xff]
      %v163 = vld [vmem:[#allocation2 + $0x30] sm:$0xff]
      %v164 = vld [vmem:[#allocation2 + $0x38] sm:$0xff]
      %v165 = vld [vmem:[%s138] sm:$0xff]
      %v166 = vld [vmem:[%s138 + $0x8] sm:$0xff]
      %v167 = vld [vmem:[%s138 + $0x10] sm:$0xff]
      %v168 = vld [vmem:[%s138 + $0x18] sm:$0xff]
      %v169 = vld [vmem:[%s138 + $0x20] sm:$0xff]
      %v170 = vld [vmem:[%s138 + $0x28] sm:$0xff]
      %v171 = vld [vmem:[%s138 + $0x30] sm:$0xff]
      %v172 = vld [vmem:[%s138 + $0x38] sm:$0xff]
      %v173 = vadd.f32 %v157, %v165
      %v174 = vadd.f32 %v158, %v166
      %v175 = vadd.f32 %v159, %v167
      %v176 = vadd.f32 %v160, %v168
      %v177 = vadd.f32 %v161, %v169
      %v178 = vadd.f32 %v162, %v170
      %v179 = vadd.f32 %v163, %v171
      %v180 = vadd.f32 %v164, %v172
      %181 = vst [vmem:[#allocation2] sm:$0xff] %v173
      %182 = vst [vmem:[#allocation2 + $0x8] sm:$0xff] %v174
      %183 = vst [vmem:[#allocation2 + $0x10] sm:$0xff] %v175
      %184 = vst [vmem:[#allocation2 + $0x18] sm:$0xff] %v176
      %185 = vst [vmem:[#allocation2 + $0x20] sm:$0xff] %v177
      %186 = vst [vmem:[#allocation2 + $0x28] sm:$0xff] %v178
      %187 = vst [vmem:[#allocation2 + $0x30] sm:$0xff] %v179
      %188 = vst [vmem:[#allocation2 + $0x38] sm:$0xff] %v180
      // Predicated region
      $region29: #{discretization_loss.1} parent=23 // pred_check
        %p189 = pneg %p145
      $region30: #{discretization_loss.1} parent=23 // pred_check_branch
        %191 = sbr.rel (%p189) target = $region32
      $region31: #{discretization_loss.1} parent=23 // pred_region
        %v192 = vld [vmem:[#allocation2] sm:$0xff]
        %v193 = vld [vmem:[#allocation2 + $0x8] sm:$0xff]
        %v194 = vld [vmem:[#allocation2 + $0x10] sm:$0xff]
        %v195 = vld [vmem:[#allocation2 + $0x18] sm:$0xff]
        %v196 = vld [vmem:[#allocation2 + $0x20] sm:$0xff]
        %v197 = vld [vmem:[#allocation2 + $0x28] sm:$0xff]
        %v198 = vld [vmem:[#allocation2 + $0x30] sm:$0xff]
        %v199 = vld [vmem:[#allocation2 + $0x38] sm:$0xff]
        %v200 = vadd.f32 %v192, %v193
        %201 = vadd.xlane.f32.xlu0 %v200
        %v202 = vpop.xlane.xlu0 %201
        %v203 = vadd.f32 %v194, %v195
        %204 = vadd.xlane.f32.xlu0 %v203
        %v205 = vpop.xlane.xlu0 %204
        %v206 = vadd.f32 %v196, %v197
        %207 = vadd.xlane.f32.xlu0 %v206
        %v208 = vpop.xlane.xlu0 %207
        %v209 = vadd.f32 %v198, %v199
        %210 = vadd.xlane.f32.xlu0 %v209
        %v211 = vpop.xlane.xlu0 %210
        %vm212 = vcmask 7168
        %213 = vst.msk [vmem:[%s144] sm:$0xff] %vm212, %v202
        %214 = vst.msk [vmem:[%s144 + $0x8] sm:$0xff] %vm212, %v205
        %215 = vst.msk [vmem:[%s144 + $0x10] sm:$0xff] %vm212, %v208
        %216 = vst.msk [vmem:[%s144 + $0x18] sm:$0xff] %vm212, %v211
      $region32: #{discretization_loss.1} parent=23 // pred_fallthru
        _
      %p217 = scmp.lt.s32.totalorder %s16, 1
      %s218 = scalar_select %p217, %s16, 1
      %s219 = smul.addr %s218, 4
      %s220 = smul.addr %s219, 8
      %s221 = scalar_lea.vmem %s1, %s220
      // Predicated region
      $region33: #{discretization_loss.1} parent=23 // pred_check
        %p222 = pneg %p70
      $region34: #{discretization_loss.1} parent=23 // pred_check_branch
        %224 = sbr.rel (%p222) target = $region36
      $region35: #{discretization_loss.1} parent=23 // pred_region
        _
      $region36: #{discretization_loss.1} parent=23 // pred_fallthru
        _
    $region24: #{discretization_loss.1} parent=5 // pred_fallthru
      _
    %p225 = scmp.le.s32.totalorder 2, %s7
    // Predicated region
    $region37: #{discretization_loss.1} parent=5 // pred_check
      %p226 = pneg %p225
    $region38: #{discretization_loss.1} parent=5 // pred_check_branch
      %228 = sbr.rel (%p226) target = $region40
    $region39: #{discretization_loss.1} parent=5 // pred_region
      %s229 = ssub.s32 %s7, 2
      // Predicated region
      $region41: #{discretization_loss.1} parent=39 // pred_check
        %p230 = pneg %p76
      $region42: #{discretization_loss.1} parent=39 // pred_check_branch
        %232 = sbr.rel (%p230) target = $region44
      $region43: #{discretization_loss.1} parent=39 // pred_region
        %p233 = scmp.lt.s32.totalorder %s18, 1
        %s234 = scalar_select %p233, %s18, 1
        %s235 = smul.addr %s234, 4
        %s236 = smul.addr %s235, 8
        %s237 = scalar_lea.vmem %s1, %s236
      $region44: #{discretization_loss.1} parent=39 // pred_fallthru
        _
    $region40: #{discretization_loss.1} parent=5 // pred_fallthru
      _
  $region6: #{discretization_loss.1} parent=0 // loop_footer
    %s11 = sadd.s32 1, %s7
  $region7: #{discretization_loss.1} parent=0 // loop_footer_branch
    %6 = sbr.rel target = $region3
  $region8: #{discretization_loss.1} parent=0 // loop_exit
    _

</llo_original>
